<compile_context>
chip_gen: v7x
topology: tpu7x:2x2x1
jax: 0.10.0
libtpu: 0.0.40
codegen_flags: <defaults>
</compile_context>

<pallas_src>
import functools

import jax
import jax.numpy as jnp
from jax import lax
from jax.experimental import pallas as pl
from jax.experimental.pallas import tpu as pltpu


# ---------------------------------------------------------------------------
# Fused single-pass SE kernel: pool -> FC -> ReLU -> FC -> sigmoid -> scale
# ---------------------------------------------------------------------------
def _se_fused_kernel(x_ref, w1_ref, w2_ref, o_ref, *, hw_valid):
    # x_ref: (Bt, C, HW) native dtype; w1: (C, Cr); w2: (Cr, C); o_ref like x.
    x = x_ref[...]
    bt, c, hw = x.shape

    # --- squeeze: global average pool (f32 accumulation) ---
    if x.dtype == jnp.float32:
        # Already f32: exact VPU sum, no cast / no extra temporary.
        pooled = jnp.sum(x, axis=-1)                              # (Bt, C)
    else:
        # Sub-32-bit inputs: ones-vector MXU matmul in native dtype, f32
        # accumulate -> avoids materializing a full-block f32 copy of x.
        ones = jnp.ones((hw, 1), x.dtype)
        pooled = lax.dot_general(
            x.reshape(bt * c, hw), ones,
            dimension_numbers=(((1,), (0,)), ((), ())),
            preferred_element_type=jnp.float32).reshape(bt, c)    # (Bt, C)
    pooled = pooled * (1.0 / hw_valid)

    # --- excitation: FC -> ReLU -> FC -> sigmoid (tiny, f32) ---
    h = jnp.dot(pooled, w1_ref[...].astype(jnp.float32),
                preferred_element_type=jnp.float32)               # (Bt, Cr)
    h = jnp.maximum(h, 0.0)
    s = jnp.dot(h, w2_ref[...].astype(jnp.float32),
                preferred_element_type=jnp.float32)               # (Bt, C)
    s = jax.nn.sigmoid(s)

    # --- scale: per-channel gate broadcast over spatial, native dtype store ---
    o_ref[...] = x * s.astype(x.dtype)[:, :, None]


# ---------------------------------------------------------------------------
# Two-pass HW-tiled fallback (single image row exceeds the block budget)
# ---------------------------------------------------------------------------
def _se_pool_kernel(x_ref, pooled_ref, *, hw_valid, hw_tile):
    t = pl.program_id(1)

    @pl.when(t == 0)
    def _init():
        pooled_ref[...] = jnp.zeros_like(pooled_ref)

    x = x_ref[...]                                    # (1, C, HWt) native dtype
    # Mask lanes past the true spatial extent (last HW tile may be partial).
    lane = lax.broadcasted_iota(jnp.int32, x.shape, 2)
    valid = (t * hw_tile + lane) < hw_valid
    xm = jnp.where(valid, x, jnp.zeros_like(x))

    if xm.dtype == jnp.float32:
        part = jnp.sum(xm, axis=-1, keepdims=True)            # (1, C, 1) f32
    else:
        ones = jnp.ones((x.shape[-1], 1), x.dtype)
        part = lax.dot_general(
            xm.reshape(x.shape[1], x.shape[2]), ones,
            dimension_numbers=(((1,), (0,)), ((), ())),
            preferred_element_type=jnp.float32).reshape(pooled_ref.shape)
    pooled_ref[...] += part.astype(jnp.float32)

    @pl.when(t == pl.num_programs(1) - 1)
    def _final():
        pooled_ref[...] = pooled_ref[...] * (1.0 / hw_valid)


def _se_scale_kernel(x_ref, gate_ref, o_ref):
    x = x_ref[...]                                    # (1, C, HWt)
    o_ref[...] = x * gate_ref[...].astype(x.dtype)    # gate: (1, C, 1) f32


# ---------------------------------------------------------------------------
# Wrapper
# ---------------------------------------------------------------------------
def _tpu_vmem_capacity_bytes():
    try:
        return int(pltpu.get_tpu_info().vmem_capacity_bytes)
    except Exception:
        return 64 << 20          # conservative (v7x-class) fallback


def _pick_bt(B, per_row_bytes, max_block_bytes):
    """Largest Bt dividing B with block <= max_block_bytes, preferring >= 4
    grid steps (>= 2 per TensorCore on v7x / steady pipeline on single-TC),
    then >= 2, then any.  Returns None if even Bt=1 exceeds the budget."""
    divisors = [bt for bt in range(1, B + 1) if B % bt == 0]
    fitting = [bt for bt in divisors if bt * per_row_bytes <= max_block_bytes]
    if not fitting:
        return None
    for min_steps in (4, 2, 1):
        pref = [bt for bt in fitting if B // bt >= min_steps]
        if pref:
            return max(pref)
    return max(fitting)


def se_layer(x, w1, w2, *, max_block_bytes=None):
    """SELayer forward.  x: (B, C, H, W) NCHW.
    w1 = fc[0].weight.T with shape (C, C//r); w2 = fc[2].weight.T, (C//r, C)."""
    B, C, H, W = x.shape
    HW = H * W
    Cr = w1.shape[1]
    itemsize = x.dtype.itemsize

    vmem_cap = _tpu_vmem_capacity_bytes()
    if max_block_bytes is None:
        # ~8 MiB streaming blocks on 128-MiB-VMEM chips (v5e/v6e),
        # ~4 MiB on 64-MiB-VMEM chips (v7x).
        max_block_bytes = (8 << 20) if vmem_cap >= (96 << 20) else (4 << 20)

    x_flat = x.reshape(B, C, HW)      # unpadded; full-extent last dim in specs
    w_bytes = w1.size * w1.dtype.itemsize + w2.size * w2.dtype.itemsize
    flops = 3 * B * C * HW + 4 * B * C * Cr
    bytes_accessed = 2 * B * C * HW * itemsize + w_bytes

    per_row = C * HW * itemsize
    Bt = _pick_bt(B, per_row, max_block_bytes)

    if Bt is not None:
        # ------------------- single fused streaming pass -------------------
        block_bytes = Bt * per_row
        # 2x double-buffered input + 2x output + weights + headroom,
        # capped at 3/4 of physical VMEM (keeps v7x's 64 MiB safe).
        vmem_limit = int(min(max(16 << 20, 4 * block_bytes + w_bytes + (4 << 20)),
                             (vmem_cap * 3) // 4))
        kernel = functools.partial(_se_fused_kernel, hw_valid=HW)

        out_flat = pl.pallas_call(
            kernel,
            out_shape=jax.ShapeDtypeStruct((B, C, HW), x.dtype),
            grid_spec=pltpu.PrefetchScalarGridSpec(
                num_scalar_prefetch=0,
                grid=(B // Bt,),
                in_specs=[
                    pl.BlockSpec((Bt, C, HW), lambda g: (g, 0, 0)),
                    pl.BlockSpec((C, Cr), lambda g: (0, 0)),   # grid-invariant
                    pl.BlockSpec((Cr, C), lambda g: (0, 0)),   # (fetched once)
                ],
                out_specs=pl.BlockSpec((Bt, C, HW), lambda g: (g, 0, 0)),
            ),
            compiler_params=pltpu.CompilerParams(
                dimension_semantics=("parallel",),
                vmem_limit_bytes=vmem_limit),
            cost_estimate=pl.CostEstimate(
                flops=flops, transcendentals=B * C,
                bytes_accessed=bytes_accessed),
        )(x_flat, w1, w2)
        return out_flat.reshape(B, C, H, W)

    # --------------- two-pass HW-tiled fallback (huge rows) ----------------
    hw_tile = max(128, (max_block_bytes // (C * itemsize)) // 128 * 128)
    n_t = pl.cdiv(HW, hw_tile)
    block_bytes = C * hw_tile * itemsize
    vmem_limit = int(min(max(16 << 20, 4 * block_bytes + (4 << 20)),
                         (vmem_cap * 3) // 4))

    pooled = pl.pallas_call(
        functools.partial(_se_pool_kernel, hw_valid=HW, hw_tile=hw_tile),
        out_shape=jax.ShapeDtypeStruct((B, C, 1), jnp.float32),
        grid_spec=pltpu.PrefetchScalarGridSpec(
            num_scalar_prefetch=0,
            grid=(B, n_t),
            in_specs=[pl.BlockSpec((1, C, hw_tile), lambda b, t: (b, 0, t))],
            out_specs=pl.BlockSpec((1, C, 1), lambda b, t: (b, 0, 0)),
        ),
        compiler_params=pltpu.CompilerParams(
            dimension_semantics=("parallel", "arbitrary"),
            vmem_limit_bytes=vmem_limit),
        cost_estimate=pl.CostEstimate(
            flops=B * C * HW, transcendentals=0,
            bytes_accessed=B * C * HW * itemsize),
    )(x_flat)

    # Tiny excitation FC chain on (B, C) in plain JAX (no feature-map traffic).
    p = pooled[:, :, 0]
    h = jnp.maximum(jnp.dot(p, w1.astype(jnp.float32)), 0.0)
    gate = jax.nn.sigmoid(jnp.dot(h, w2.astype(jnp.float32)))[:, :, None]

    out_flat = pl.pallas_call(
        _se_scale_kernel,
        out_shape=jax.ShapeDtypeStruct((B, C, HW), x.dtype),
        grid_spec=pltpu.PrefetchScalarGridSpec(
            num_scalar_prefetch=0,
            grid=(B, n_t),
            in_specs=[
                pl.BlockSpec((1, C, hw_tile), lambda b, t: (b, 0, t)),
                pl.BlockSpec((1, C, 1), lambda b, t: (b, 0, 0)),
            ],
            out_specs=pl.BlockSpec((1, C, hw_tile), lambda b, t: (b, 0, t)),
        ),
        compiler_params=pltpu.CompilerParams(
            dimension_semantics=("parallel", "parallel"),
            vmem_limit_bytes=vmem_limit),
        cost_estimate=pl.CostEstimate(
            flops=B * C * HW, transcendentals=0,
            bytes_accessed=2 * B * C * HW * itemsize),
    )(x_flat, gate)
    return out_flat.reshape(B, C, H, W)


def se_layer_ref(x, w1, w2):
    """Pure-JAX reference matching the PyTorch SELayer forward."""
    pooled = jnp.mean(x, axis=(2, 3))                       # (B, C)
    h = jnp.maximum(pooled @ w1, 0.0)                       # (B, Cr)
    s = jax.nn.sigmoid(h @ w2)                              # (B, C)
    return x * s[:, :, None, None]


if __name__ == "__main__":
    key = jax.random.PRNGKey(0)

    # SE configs as used inside MaskEncoder (reduction=2), small spatial sizes.
    #   (B, C, H, W, reduction, forced_block_cap)
    configs = [
        (4, 128, 8, 16, 2, None),       # se1-like: HW=128, 4 fused grid steps
        (2, 256, 6, 10, 2, None),       # se2-like: HW=60 (non-128-multiple last dim)
        (2, 128, 8, 50, 2, 64 << 10),   # tiny forced cap -> exercises two-pass path
    ]

    for (B, C, H, W, r, cap) in configs:
        key, kx, k1, k2 = jax.random.split(key, 4)
        Cr = C // r
        x = jax.random.normal(kx, (B, C, H, W), dtype=jnp.float32)
        # PyTorch Linear stores (out, in); weights kept pre-transposed as (in, out).
        w1 = jax.random.normal(k1, (C, Cr), dtype=jnp.float32) * (1.0 / jnp.sqrt(C))
        w2 = jax.random.normal(k2, (Cr, C), dtype=jnp.float32) * (1.0 / jnp.sqrt(Cr))

        out = jax.block_until_ready(se_layer(x, w1, w2, max_block_bytes=cap))
        ref = jax.block_until_ready(se_layer_ref(x, w1, w2))

        assert out.shape == (B, C, H, W)
        assert jnp.allclose(out, ref, atol=1e-5, rtol=1e-5), \
            f"Pallas output mismatch vs reference for config {(B, C, H, W, r)}"

    print("KERNEL_OK")
</pallas_src>

<mosaic_0001>
module attributes {stable_mosaic.version = 11 : i64} {
  func.func @_se_fused_kernel(%arg0: i32, %arg1: memref<1x128x128xf32, #tpu.memory_space<vmem>>, %arg2: memref<128x64xf32, #tpu.memory_space<vmem>>, %arg3: memref<64x128xf32, #tpu.memory_space<vmem>>, %arg4: memref<1x128x128xf32, #tpu.memory_space<vmem>>) attributes {dimension_semantics = [#tpu.dimension_semantics<parallel>], iteration_bounds = array<i64: 4>, scalar_prefetch = 0 : i64, scratch_operands = 0 : i64, tpu.core_type = #tpu.core_type<tc>, window_params = [{transform_indices = @transform_0, window_bounds = array<i64: 1, 128, 128>}, {pipeline_mode = #tpu.pipeline_mode<synchronous>, transform_indices = @transform_1, window_bounds = array<i64: 128, 64>}, {pipeline_mode = #tpu.pipeline_mode<synchronous>, transform_indices = @transform_2, window_bounds = array<i64: 64, 128>}, {transform_indices = @transform_3, window_bounds = array<i64: 1, 128, 128>}]} {
    %c0 = arith.constant 0 : index
    %c0_0 = arith.constant 0 : index
    %c0_1 = arith.constant 0 : index
    %0 = vector.load %arg1[%c0, %c0_0, %c0_1] : memref<1x128x128xf32, #tpu.memory_space<vmem>>, vector<1x128x128xf32>
    %cst = arith.constant dense<0.000000e+00> : vector<1x128xf32>
    %1 = vector.multi_reduction <add>, %0, %cst [2] : vector<1x128x128xf32> to vector<1x128xf32>
    %cst_2 = arith.constant 7.812500e-03 : f32
    %2 = vector.broadcast %cst_2 : f32 to vector<1x128xf32>
    %3 = arith.mulf %1, %2 : vector<1x128xf32>
    %c0_3 = arith.constant 0 : index
    %c0_4 = arith.constant 0 : index
    %4 = vector.load %arg2[%c0_3, %c0_4] : memref<128x64xf32, #tpu.memory_space<vmem>>, vector<128x64xf32>
    %cst_5 = arith.constant dense<0.000000e+00> : vector<1x64xf32>
    %5 = tpu.matmul %3, %4, %cst_5 {dimension_numbers = #tpu.dot_dimension_numbers<[1], [0], [0], [1], [0, 0, 1, 1], [], []>} : vector<1x128xf32>, vector<128x64xf32>, vector<1x64xf32> -> vector<1x64xf32>
    %cst_6 = arith.constant 0.000000e+00 : f32
    %6 = vector.broadcast %cst_6 : f32 to vector<1x64xf32>
    %7 = arith.maximumf %5, %6 : vector<1x64xf32>
    %c0_7 = arith.constant 0 : index
    %c0_8 = arith.constant 0 : index
    %8 = vector.load %arg3[%c0_7, %c0_8] : memref<64x128xf32, #tpu.memory_space<vmem>>, vector<64x128xf32>
    %cst_9 = arith.constant dense<0.000000e+00> : vector<1x128xf32>
    %9 = tpu.matmul %7, %8, %cst_9 {dimension_numbers = #tpu.dot_dimension_numbers<[1], [0], [0], [1], [0, 0, 1, 1], [], []>} : vector<1x64xf32>, vector<64x128xf32>, vector<1x128xf32> -> vector<1x128xf32>
    %10 = arith.negf %9 : vector<1x128xf32>
    %11 = math.exp %10 : vector<1x128xf32>
    %cst_10 = arith.constant 1.000000e+00 : f32
    %12 = vector.broadcast %cst_10 : f32 to vector<1x128xf32>
    %13 = arith.addf %12, %11 : vector<1x128xf32>
    %14 = arith.divf %12, %13 : vector<1x128xf32>
    %15 = vector.shape_cast %14 : vector<1x128xf32> to vector<1x128x1xf32>
    %16 = vector.broadcast %15 : vector<1x128x1xf32> to vector<1x128x128xf32>
    %17 = arith.mulf %0, %16 : vector<1x128x128xf32>
    %c0_11 = arith.constant 0 : index
    %c0_12 = arith.constant 0 : index
    %c0_13 = arith.constant 0 : index
    %18 = vector.load %arg4[%c0_11, %c0_12, %c0_13] : memref<1x128x128xf32, #tpu.memory_space<vmem>>, vector<1x128x128xf32>
    tpu.vector_store %arg4[%c0_11, %c0_12, %c0_13], %17 {strides = array<i32>} : memref<1x128x128xf32, #tpu.memory_space<vmem>>, vector<1x128x128xf32>,
    return
  }
  func.func @transform_0(%arg0: i32) -> (i32, i32, i32) {
    %c0_i32 = arith.constant 0 : i32
    %c0_i32_0 = arith.constant 0 : i32
    %c0_i32_1 = arith.constant 0 : i32
    return %arg0, %c0_i32, %c0_i32_0 : i32, i32, i32
  }
  func.func @transform_1(%arg0: i32) -> (i32, i32) {
    %c0_i32 = arith.constant 0 : i32
    %c0_i32_0 = arith.constant 0 : i32
    %c0_i32_1 = arith.constant 0 : i32
    return %c0_i32, %c0_i32_0 : i32, i32
  }
  func.func @transform_2(%arg0: i32) -> (i32, i32) {
    %c0_i32 = arith.constant 0 : i32
    %c0_i32_0 = arith.constant 0 : i32
    %c0_i32_1 = arith.constant 0 : i32
    return %c0_i32, %c0_i32_0 : i32, i32
  }
  func.func @transform_3(%arg0: i32) -> (i32, i32, i32) {
    %c0_i32 = arith.constant 0 : i32
    %c0_i32_0 = arith.constant 0 : i32
    %c0_i32_1 = arith.constant 0 : i32
    return %arg0, %c0_i32, %c0_i32_0 : i32, i32, i32
  }
}

</mosaic_0001>

<llo_original>
// kernel: tpu_custom_call.1
$region0: #{tpu_custom_call.1}
  #allocation0 [shape = 'u32[]', space=smem, size = 0x4, offset = 0x4, fixed_abs, tag = 'smem constant byte address 0x4 - core index']
  #allocation1 [shape = 'u32[144,128]{1,0:T(1,128)}', space=vmem, size = 0x12000, scoped, tag = 'internal scratch']
  %s0 = inlined_call_operand.hbm [shape: f32[4,128,128], index: 0, kind: input, shape index: {}]
  %s1 = inlined_call_operand.vmem [shape: f32[128,64], index: 1, kind: input, shape index: {}]
  %s2 = inlined_call_operand.vmem [shape: f32[64,128], index: 2, kind: input, shape index: {}]
  %s3 = inlined_call_operand.hbm [shape: f32[4,128,128], index: 3, kind: output, shape index: {}]
  %s4 = sld [smem:[#allocation0]]
  $region49: #{tpu_custom_call.1} parent=0
    _
  %s6 = ssub.s32 1, %s4
  %s7 = scalar_select 0, %s6, %s4
  $region1: #{tpu_custom_call.1} parent=0
    #allocation2 [shape = 'u8[131072]{0}', space=vmem, size = 0x20000, scoped, tag = 'input window, operand 0']
    #allocation3 [shape = 's32[2]{0}', space=sflag, size = 0x8, scoped, tag = 'scoped memory for tpu_custom_call.1']
    #allocation4 [shape = 's32[2]{0}', space=sflag, size = 0x8, scoped, tag = 'scoped memory for tpu_custom_call.1']
    #allocation5 [shape = 'u8[131072]{0}', space=vmem, size = 0x20000, scoped, tag = 'output window, operand 0']
    %8 = vsyncpa [#allocation3], 0
    %s9 = scalar_lea.sflag [#allocation3], 1
    %10 = vsyncpa %s9, 0
    %11 = vsyncpa [#allocation4], 0
    %s12 = scalar_lea.sflag [#allocation4], 1
    %13 = vsyncpa %s12, 0
    loop: start=0, step=1, limit=6
    $region2: #{tpu_custom_call.1} parent=1 // loop_pre_header
      _
    $region3: #{tpu_custom_call.1} parent=1 // loop_header
      %s15 = sphi 0, %s19
      %p16 = scmp.ge.s32.totalorder %s15, 6
      %s25 = sphi 0, %s27
      %s28 = sphi 0, %s25
      %s29 = sphi 0, %s28
      %s45 = sphi 0, %s29
      %s49 = sphi 0, %s49
      %s51 = sphi 0, %s49
      %s52 = sphi 0, %s51
      %s66 = sphi 0, %s52
      %s70 = sphi 0, %s70
      %s72 = sphi 0, %s70
      %s73 = sphi 0, %s72
      %s87 = sphi 0, %s73
      %s93 = sphi 0, %s95
      %s96 = sphi 0, %s93
      %s97 = sphi 0, %s96
      %s113 = sphi 0, %s97
    $region4: #{tpu_custom_call.1} parent=1 // loop_header_branch
      %18 = sbr.rel (%p16) target = $region8
    $region5: #{tpu_custom_call.1} parent=1 // loop_body
      %s20 = ssub.s32 %s15, 1
      %s21 = ssub.s32 %s15, 2
      %s22 = sadd.s32 %s15, 1
      %s23 = ssub.s32 %s15, %s22
      %p24 = scmp.eq.s32.totalorder %s23, 0
      %s26 = sadd.s32 %s25, 1
      %s27 = scalar_select %p24, %s25, %s26
      %p30 = pneg %p24
      %p31 = scmp.eq.s32.totalorder %s15, 3
      %p32 = por %p30, %p31
      %p33 = scmp.ne.s32.totalorder %s25, %s28
      %p34 = scmp.eq.s32.totalorder %s15, 0
      %p35 = por %p33, %p34
      %p36 = scmp.ne.s32.totalorder %s25, %s28
      %p37 = scmp.eq.s32.totalorder %s20, 3
      %p38 = por %p36, %p37
      %p39 = scmp.ne.s32.totalorder %s28, %s29
      %p40 = scmp.eq.s32.totalorder %s20, 0
      %p41 = por %p39, %p40
      %p42 = scmp.ne.s32.totalorder %s28, %s29
      %p43 = scmp.eq.s32.totalorder %s21, 3
      %p44 = por %p42, %p43
      %p46 = scmp.ne.s32.totalorder %s29, %s45
      %p47 = scmp.eq.s32.totalorder %s21, 0
      %p48 = por %p46, %p47
      %s50 = sadd.s32 %s49, 1
      %p53 = scmp.eq.s32.totalorder %s15, 3
      %p54 = scmp.ne.s32.totalorder %s49, %s51
      %p55 = scmp.eq.s32.totalorder %s15, 0
      %p56 = por %p54, %p55
      %p57 = scmp.ne.s32.totalorder %s49, %s51
      %p58 = scmp.eq.s32.totalorder %s20, 3
      %p59 = por %p57, %p58
      %p60 = scmp.ne.s32.totalorder %s51, %s52
      %p61 = scmp.eq.s32.totalorder %s20, 0
      %p62 = por %p60, %p61
      %p63 = scmp.ne.s32.totalorder %s51, %s52
      %p64 = scmp.eq.s32.totalorder %s21, 3
      %p65 = por %p63, %p64
      %p67 = scmp.ne.s32.totalorder %s52, %s66
      %p68 = scmp.eq.s32.totalorder %s21, 0
      %p69 = por %p67, %p68
      %s71 = sadd.s32 %s70, 1
      %p74 = scmp.eq.s32.totalorder %s15, 3
      %p75 = scmp.ne.s32.totalorder %s70, %s72
      %p76 = scmp.eq.s32.totalorder %s15, 0
      %p77 = por %p75, %p76
      %p78 = scmp.ne.s32.totalorder %s70, %s72
      %p79 = scmp.eq.s32.totalorder %s20, 3
      %p80 = por %p78, %p79
      %p81 = scmp.ne.s32.totalorder %s72, %s73
      %p82 = scmp.eq.s32.totalorder %s20, 0
      %p83 = por %p81, %p82
      %p84 = scmp.ne.s32.totalorder %s72, %s73
      %p85 = scmp.eq.s32.totalorder %s21, 3
      %p86 = por %p84, %p85
      %p88 = scmp.ne.s32.totalorder %s73, %s87
      %p89 = scmp.eq.s32.totalorder %s21, 0
      %p90 = por %p88, %p89
      %s91 = ssub.s32 %s15, %s22
      %p92 = scmp.eq.s32.totalorder %s91, 0
      %s94 = sadd.s32 %s93, 1
      %s95 = scalar_select %p92, %s93, %s94
      %p98 = pneg %p92
      %p99 = scmp.eq.s32.totalorder %s15, 3
      %p100 = por %p98, %p99
      %p101 = scmp.ne.s32.totalorder %s93, %s96
      %p102 = scmp.eq.s32.totalorder %s15, 0
      %p103 = por %p101, %p102
      %p104 = scmp.ne.s32.totalorder %s93, %s96
      %p105 = scmp.eq.s32.totalorder %s20, 3
      %p106 = por %p104, %p105
      %p107 = scmp.ne.s32.totalorder %s96, %s97
      %p108 = scmp.eq.s32.totalorder %s20, 0
      %p109 = por %p107, %p108
      %p110 = scmp.ne.s32.totalorder %s96, %s97
      %p111 = scmp.eq.s32.totalorder %s21, 3
      %p112 = por %p110, %p111
      %p114 = scmp.ne.s32.totalorder %s97, %s113
      %p115 = scmp.eq.s32.totalorder %s21, 0
      %p116 = por %p114, %p115
      %p117 = scmp.le.s32.totalorder 1, %s15
      %p118 = scmp.lt.s32.totalorder %s15, 5
      %p119 = pnand %p117, %p118
      %p120 = pneg %p119
      // Predicated region
      $region9: #{tpu_custom_call.1} parent=5 // pred_check
        _
      $region10: #{tpu_custom_call.1} parent=5 // pred_check_branch
        %122 = sbr.rel (%p119) target = $region12
      $region11: #{tpu_custom_call.1} parent=5 // pred_region
        %s123 = ssub.s32 %s15, 1
        // Predicated region
        $region13: #{tpu_custom_call.1} parent=11 // pred_check
          %p124 = pneg %p62
        $region14: #{tpu_custom_call.1} parent=11 // pred_check_branch
          %126 = sbr.rel (%p124) target = $region16
        $region15: #{tpu_custom_call.1} parent=11 // pred_region
          _
        $region16: #{tpu_custom_call.1} parent=11 // pred_fallthru
          _
        // Predicated region
        $region17: #{tpu_custom_call.1} parent=11 // pred_check
          %p127 = pneg %p83
        $region18: #{tpu_custom_call.1} parent=11 // pred_check_branch
          %129 = sbr.rel (%p127) target = $region20
        $region19: #{tpu_custom_call.1} parent=11 // pred_region
          _
        $region20: #{tpu_custom_call.1} parent=11 // pred_fallthru
          _
      $region12: #{tpu_custom_call.1} parent=5 // pred_fallthru
        _
      %p130 = scmp.lt.s32.totalorder %s15, 4
      // Predicated region
      $region21: #{tpu_custom_call.1} parent=5 // pred_check
        %p131 = pneg %p130
      $region22: #{tpu_custom_call.1} parent=5 // pred_check_branch
        %133 = sbr.rel (%p131) target = $region24
      $region23: #{tpu_custom_call.1} parent=5 // pred_region
        // Predicated region
        $region25: #{tpu_custom_call.1} parent=23 // pred_check
          %p134 = pneg %p35
        $region26: #{tpu_custom_call.1} parent=23 // pred_check_branch
          %136 = sbr.rel (%p134) target = $region28
        $region27: #{tpu_custom_call.1} parent=23 // pred_region
          %s137 = sand.u32 %s25, 1
          %s138 = scalar_lea.sflag [#allocation3], %s137
          %s139 = sand.u32 %s25, 1
          %s140 = smul.addr %s139, 128
          %s141 = scalar_lea.vmem [#allocation2], %s140
          %s143 = ssub.s32 2048, 2048
          %144 = vsyncadd %s138, %s143
          %s145 = smul.addr %s15, 16
          %s146 = smul.addr %s145, 128
          %s147 = scalar_lea.hbm %s0, %s146
          %s148 = sshll.u32 %s141, 4
          %s149 = int_to_ptr.vmem [resolvable:$true] %s148
          %154 = dma.hbm_to_vmem [thread:$0]  %s147, 2048, %s149, %s138, 128, 128, 8
        $region28: #{tpu_custom_call.1} parent=23 // pred_fallthru
          _
      $region24: #{tpu_custom_call.1} parent=5 // pred_fallthru
        _
      %p155 = scmp.le.s32.totalorder 1, %s15
      %p156 = scmp.lt.s32.totalorder %s15, 5
      %p157 = pnand %p155, %p156
      %p158 = pneg %p157
      // Predicated region
      $region29: #{tpu_custom_call.1} parent=5 // pred_check
        _
      $region30: #{tpu_custom_call.1} parent=5 // pred_check_branch
        %160 = sbr.rel (%p157) target = $region32
      $region31: #{tpu_custom_call.1} parent=5 // pred_region
        %s161 = ssub.s32 %s15, 1
        %s162 = sand.u32 %s28, 1
        %s163 = scalar_lea.sflag [#allocation3], %s162
        %s164 = sand.u32 %s28, 1
        %s165 = smul.addr %s164, 128
        %s166 = scalar_lea.vmem [#allocation2], %s165
        // Predicated region
        $region33: #{tpu_custom_call.1} parent=31 // pred_check
          %p167 = pneg %p41
        $region34: #{tpu_custom_call.1} parent=31 // pred_check_branch
          %169 = sbr.rel (%p167) target = $region36
        $region35: #{tpu_custom_call.1} parent=31 // pred_region
          %170 = dma.done %s163, 2048
        $region36: #{tpu_custom_call.1} parent=31 // pred_fallthru
          _
        %s171 = sand.u32 %s28, 1
        %s172 = scalar_lea.sflag [#allocation3], %s171
        %s173 = sand.u32 %s28, 1
        %s174 = smul.addr %s173, 128
        %s175 = scalar_lea.vmem [#allocation2], %s174
        %p176 = pneg %p41
        %p177 = pneg %p38
        %p178 = pneg %p62
        %p179 = pneg %p59
        %p180 = pneg %p83
        %p181 = pneg %p80
        %p182 = pneg %p109
        %p183 = pneg %p106
        %s184 = sand.u32 %s96, 1
        %s185 = scalar_lea.sflag [#allocation4], %s184
        %s186 = sand.u32 %s96, 1
        %s187 = smul.addr %s186, 128
        %s188 = scalar_lea.vmem [#allocation5], %s187
        %v189 = vld [vmem:[%s166] sm:$0xff]
        %v190 = vld [vmem:[%s166 + $0x8] sm:$0xff]
        %v191 = vld [vmem:[%s166 + $0x10] sm:$0xff]
        %v192 = vld [vmem:[%s166 + $0x18] sm:$0xff]
        %v193 = vld [vmem:[%s166 + $0x20] sm:$0xff]
        %v194 = vld [vmem:[%s166 + $0x28] sm:$0xff]
        %v195 = vld [vmem:[%s166 + $0x30] sm:$0xff]
        %v196 = vld [vmem:[%s166 + $0x38] sm:$0xff]
        %v197 = vld [vmem:[%s166 + $0x40] sm:$0xff]
        %v198 = vld [vmem:[%s166 + $0x48] sm:$0xff]
        %v199 = vld [vmem:[%s166 + $0x50] sm:$0xff]
        %v200 = vld [vmem:[%s166 + $0x58] sm:$0xff]
        %v201 = vld [vmem:[%s166 + $0x60] sm:$0xff]
        %v202 = vld [vmem:[%s166 + $0x68] sm:$0xff]
        %v203 = vld [vmem:[%s166 + $0x70] sm:$0xff]
        %v204 = vld [vmem:[%s166 + $0x78] sm:$0xff]
        %205 = vadd.xlane.f32.xlu0 %v189
        %v206 = vpop.xlane.xlu0 %205
        %207 = vadd.xlane.f32.xlu0 %v190
        %v208 = vpop.xlane.xlu0 %207
        %209 = vadd.xlane.f32.xlu0 %v191
        %v210 = vpop.xlane.xlu0 %209
        %211 = vadd.xlane.f32.xlu0 %v192
        %v212 = vpop.xlane.xlu0 %211
        %213 = vadd.xlane.f32.xlu0 %v193
        %v214 = vpop.xlane.xlu0 %213
        %215 = vadd.xlane.f32.xlu0 %v194
        %v216 = vpop.xlane.xlu0 %215
        %217 = vadd.xlane.f32.xlu0 %v195
        %v218 = vpop.xlane.xlu0 %217
        %219 = vadd.xlane.f32.xlu0 %v196
        %v220 = vpop.xlane.xlu0 %219
        %221 = vadd.xlane.f32.xlu0 %v197
        %v222 = vpop.xlane.xlu0 %221
        %223 = vadd.xlane.f32.xlu0 %v198
        %v224 = vpop.xlane.xlu0 %223
        %225 = vadd.xlane.f32.xlu0 %v199
        %v226 = vpop.xlane.xlu0 %225
        %227 = vadd.xlane.f32.xlu0 %v200
        %v228 = vpop.xlane.xlu0 %227
        %229 = vadd.xlane.f32.xlu0 %v201
        %v230 = vpop.xlane.xlu0 %229
        %231 = vadd.xlane.f32.xlu0 %v202
        %v232 = vpop.xlane.xlu0 %231
        %233 = vadd.xlane.f32.xlu0 %v203
        %v234 = vpop.xlane.xlu0 %233
        %235 = vadd.xlane.f32.xlu0 %v204
        %v236 = vpop.xlane.xlu0 %235
        %v237 = vmul.f32 %v206, 0.0078125
        %v238 = vmul.f32 %v208, 0.0078125
        %v239 = vmul.f32 %v210, 0.0078125
        %v240 = vmul.f32 %v212, 0.0078125
        %v241 = vmul.f32 %v214, 0.0078125
        %v242 = vmul.f32 %v216, 0.0078125
        %v243 = vmul.f32 %v218, 0.0078125
        %v244 = vmul.f32 %v220, 0.0078125
        %v245 = vmul.f32 %v222, 0.0078125
        %v246 = vmul.f32 %v224, 0.0078125
        %v247 = vmul.f32 %v226, 0.0078125
        %v248 = vmul.f32 %v228, 0.0078125
        %v249 = vmul.f32 %v230, 0.0078125
        %v250 = vmul.f32 %v232, 0.0078125
        %v251 = vmul.f32 %v234, 0.0078125
        %v252 = vmul.f32 %v236, 0.0078125
        %v253 = vld [vmem:[%s1] sm:$0xff]
        %v254 = vld [vmem:[%s1 + $0x8] sm:$0xff]
        %v255 = vld [vmem:[%s1 + $0x10] sm:$0xff]
        %v256 = vld [vmem:[%s1 + $0x18] sm:$0xff]
        %v257 = vld [vmem:[%s1 + $0x20] sm:$0xff]
        %v258 = vld [vmem:[%s1 + $0x28] sm:$0xff]
        %v259 = vld [vmem:[%s1 + $0x30] sm:$0xff]
        %v260 = vld [vmem:[%s1 + $0x38] sm:$0xff]
        %v261 = vld [vmem:[%s1 + $0x40] sm:$0xff]
        %v262 = vld [vmem:[%s1 + $0x48] sm:$0xff]
        %v263 = vld [vmem:[%s1 + $0x50] sm:$0xff]
        %v264 = vld [vmem:[%s1 + $0x58] sm:$0xff]
        %v265 = vld [vmem:[%s1 + $0x60] sm:$0xff]
        %v266 = vld [vmem:[%s1 + $0x68] sm:$0xff]
        %v267 = vld [vmem:[%s1 + $0x70] sm:$0xff]
        %v268 = vld [vmem:[%s1 + $0x78] sm:$0xff]
        %v285 = vlaneseq
        %v286 = vand.u32 %v285, 127
        %v287 = vlaneseq
        %v288 = vshrl.u32 %v287, 7
        %v289 = vsub.s32 %v286, %v288
        %v290 = vrot.slane %v237, %v289
        %v291 = vadd.s32 %v286, 4294967288
        %v292 = vlaneseq
        %v293 = vshrl.u32 %v292, 7
        %v294 = vsub.s32 %v291, %v293
        %v295 = vrot.slane %v238, %v294
        %vm296 = vcmask 130112
        %v297 = vsel %vm296, %v295, %v290
        %v298 = vadd.s32 %v286, 4294967280
        %v299 = vlaneseq
        %v300 = vshrl.u32 %v299, 7
        %v301 = vsub.s32 %v298, %v300
        %v302 = vrot.slane %v239, %v301
        %vm303 = vcmask 195712
        %v304 = vsel %vm303, %v302, %v297
        %v305 = vadd.s32 %v286, 4294967272
        %v306 = vlaneseq
        %v307 = vshrl.u32 %v306, 7
        %v308 = vsub.s32 %v305, %v307
        %v309 = vrot.slane %v240, %v308
        %vm310 = vcmask 261312
        %v311 = vsel %vm310, %v309, %v304
        %v312 = vadd.s32 %v286, 4294967264
        %v313 = vlaneseq
        %v314 = vshrl.u32 %v313, 7
        %v315 = vsub.s32 %v312, %v314
        %v316 = vrot.slane %v241, %v315
        %vm317 = vcmask 326912
        %v318 = vsel %vm317, %v316, %v311
        %v319 = vadd.s32 %v286, 4294967256
        %v320 = vlaneseq
        %v321 = vshrl.u32 %v320, 7
        %v322 = vsub.s32 %v319, %v321
        %v323 = vrot.slane %v242, %v322
        %vm324 = vcmask 392512
        %v325 = vsel %vm324, %v323, %v318
        %v326 = vadd.s32 %v286, 4294967248
        %v327 = vlaneseq
        %v328 = vshrl.u32 %v327, 7
        %v329 = vsub.s32 %v326, %v328
        %v330 = vrot.slane %v243, %v329
        %vm331 = vcmask 458112
        %v332 = vsel %vm331, %v330, %v325
        %v333 = vadd.s32 %v286, 4294967240
        %v334 = vlaneseq
        %v335 = vshrl.u32 %v334, 7
        %v336 = vsub.s32 %v333, %v335
        %v337 = vrot.slane %v244, %v336
        %vm338 = vcmask 523712
        %v339 = vsel %vm338, %v337, %v332
        %v340 = vadd.s32 %v286, 4294967232
        %v341 = vlaneseq
        %v342 = vshrl.u32 %v341, 7
        %v343 = vsub.s32 %v340, %v342
        %v344 = vrot.slane %v245, %v343
        %vm345 = vcmask 589312
        %v346 = vsel %vm345, %v344, %v339
        %v347 = vadd.s32 %v286, 4294967224
        %v348 = vlaneseq
        %v349 = vshrl.u32 %v348, 7
        %v350 = vsub.s32 %v347, %v349
        %v351 = vrot.slane %v246, %v350
        %vm352 = vcmask 654912
        %v353 = vsel %vm352, %v351, %v346
        %v354 = vadd.s32 %v286, 4294967216
        %v355 = vlaneseq
        %v356 = vshrl.u32 %v355, 7
        %v357 = vsub.s32 %v354, %v356
        %v358 = vrot.slane %v247, %v357
        %vm359 = vcmask 720512
        %v360 = vsel %vm359, %v358, %v353
        %v361 = vadd.s32 %v286, 4294967208
        %v362 = vlaneseq
        %v363 = vshrl.u32 %v362, 7
        %v364 = vsub.s32 %v361, %v363
        %v365 = vrot.slane %v248, %v364
        %vm366 = vcmask 786112
        %v367 = vsel %vm366, %v365, %v360
        %v368 = vadd.s32 %v286, 4294967200
        %v369 = vlaneseq
        %v370 = vshrl.u32 %v369, 7
        %v371 = vsub.s32 %v368, %v370
        %v372 = vrot.slane %v249, %v371
        %vm373 = vcmask 851712
        %v374 = vsel %vm373, %v372, %v367
        %v375 = vadd.s32 %v286, 4294967192
        %v376 = vlaneseq
        %v377 = vshrl.u32 %v376, 7
        %v378 = vsub.s32 %v375, %v377
        %v379 = vrot.slane %v250, %v378
        %vm380 = vcmask 917312
        %v381 = vsel %vm380, %v379, %v374
        %v382 = vadd.s32 %v286, 4294967184
        %v383 = vlaneseq
        %v384 = vshrl.u32 %v383, 7
        %v385 = vsub.s32 %v382, %v384
        %v386 = vrot.slane %v251, %v385
        %vm387 = vcmask 982912
        %v388 = vsel %vm387, %v386, %v381
        %v389 = vadd.s32 %v286, 4294967176
        %v390 = vlaneseq
        %v391 = vshrl.u32 %v390, 7
        %v392 = vsub.s32 %v389, %v391
        %v393 = vrot.slane %v252, %v392
        %vm394 = vcmask 1048512
        %v395 = vsel %vm394, %v393, %v388
        %397 = vmatprep.subr.mxu0 0.0
        %398 = vmatpush1.msra.mxu0 %v253
        %399 = vmatprep.subr.mxu0 0.0
        %400 = vmatpush1.msra.mxu0 %v254
        %401 = vmatprep.subr.mxu0 0.0
        %402 = vmatpush1.msra.mxu0 %v255
        %403 = vmatprep.subr.mxu0 0.0
        %404 = vmatpush1.msra.mxu0 %v256
        %405 = vmatprep.subr.mxu0 0.0
        %406 = vmatpush1.msra.mxu0 %v257
        %407 = vmatprep.subr.mxu0 0.0
        %408 = vmatpush1.msra.mxu0 %v258
        %409 = vmatprep.subr.mxu0 0.0
        %410 = vmatpush1.msra.mxu0 %v259
        %411 = vmatprep.subr.mxu0 0.0
        %412 = vmatpush1.msra.mxu0 %v260
        %413 = vmatprep.subr.mxu0 0.0
        %414 = vmatpush1.msra.mxu0 %v261
        %415 = vmatprep.subr.mxu0 0.0
        %416 = vmatpush1.msra.mxu0 %v262
        %417 = vmatprep.subr.mxu0 0.0
        %418 = vmatpush1.msra.mxu0 %v263
        %419 = vmatprep.subr.mxu0 0.0
        %420 = vmatpush1.msra.mxu0 %v264
        %421 = vmatprep.subr.mxu0 0.0
        %422 = vmatpush1.msra.mxu0 %v265
        %423 = vmatprep.subr.mxu0 0.0
        %424 = vmatpush1.msra.mxu0 %v266
        %425 = vmatprep.subr.mxu0 0.0
        %426 = vmatpush1.msra.mxu0 %v267
        %427 = vmatprep.subr.mxu0 0.0
        %428 = vmatpush1.msra.mxu0 %v268
        %429 = vmatprep.subr.mxu0 0.0
        %430 = vmatpush1.msra.mxu0 0.0
        %431 = vmatprep.subr.mxu0 0.0
        %432 = vmatpush1.msra.mxu0 0.0
        %433 = vmatprep.subr.mxu0 0.0
        %434 = vmatpush1.msra.mxu0 0.0
        %435 = vmatprep.subr.mxu0 0.0
        %436 = vmatpush1.msra.mxu0 0.0
        %437 = vmatprep.subr.mxu0 0.0
        %438 = vmatpush1.msra.mxu0 0.0
        %439 = vmatprep.subr.mxu0 0.0
        %440 = vmatpush1.msra.mxu0 0.0
        %441 = vmatprep.subr.mxu0 0.0
        %442 = vmatpush1.msra.mxu0 0.0
        %443 = vmatprep.subr.mxu0 0.0
        %444 = vmatpush1.msra.mxu0 0.0
        %445 = vmatprep.subr.mxu0 0.0
        %446 = vmatpush1.msra.mxu0 0.0
        %447 = vmatprep.subr.mxu0 0.0
        %448 = vmatpush1.msra.mxu0 0.0
        %449 = vmatprep.subr.mxu0 0.0
        %450 = vmatpush1.msra.mxu0 0.0
        %451 = vmatprep.subr.mxu0 0.0
        %452 = vmatpush1.msra.mxu0 0.0
        %453 = vmatprep.subr.mxu0 0.0
        %454 = vmatpush1.msra.mxu0 0.0
        %455 = vmatprep.subr.mxu0 0.0
        %456 = vmatpush1.msra.mxu0 0.0
        %457 = vmatprep.subr.mxu0 0.0
        %458 = vmatpush1.msra.mxu0 0.0
        %459 = vmatprep.subr.mxu0 0.0
        %460 = vmatpush1.msra.mxu0 0.0
        %461 = vmatprep.mubr.f32.mxu0 0.0
        %462 = vmatmul.mubr.f32.gmra.mrb[0].mxu0 %v395
        %v463 = vpop.f32.mrb[0].mxu0
        %v464 = vadd.f32 0.0, %v463
        %v465 = vpop.f32.mrb[0].mxu0
        %466 = vdwg.mxu0
        %v467 = vmax.f32 %v464, 0.0
        %v468 = vld [vmem:[%s2] sm:$0xff]
        %v469 = vld [vmem:[%s2 + $0x8] sm:$0xff]
        %v470 = vld [vmem:[%s2 + $0x10] sm:$0xff]
        %v471 = vld [vmem:[%s2 + $0x18] sm:$0xff]
        %v472 = vld [vmem:[%s2 + $0x20] sm:$0xff]
        %v473 = vld [vmem:[%s2 + $0x28] sm:$0xff]
        %v474 = vld [vmem:[%s2 + $0x30] sm:$0xff]
        %v475 = vld [vmem:[%s2 + $0x38] sm:$0xff]
        %vm476 = vcmask 523264
        %v478 = vsel %vm476, %v467, 0
        %480 = vmatprep.subr.mxu0 0.0
        %481 = vmatpush1.msra.mxu0 %v468
        %482 = vmatprep.subr.mxu0 0.0
        %483 = vmatpush1.msra.mxu0 %v469
        %484 = vmatprep.subr.mxu0 0.0
        %485 = vmatpush1.msra.mxu0 %v470
        %486 = vmatprep.subr.mxu0 0.0
        %487 = vmatpush1.msra.mxu0 %v471
        %488 = vmatprep.subr.mxu0 0.0
        %489 = vmatpush1.msra.mxu0 %v472
        %490 = vmatprep.subr.mxu0 0.0
        %491 = vmatpush1.msra.mxu0 %v473
        %492 = vmatprep.subr.mxu0 0.0
        %493 = vmatpush1.msra.mxu0 %v474
        %494 = vmatprep.subr.mxu0 0.0
        %495 = vmatpush1.msra.mxu0 %v475
        %496 = vmatprep.subr.mxu0 0.0
        %497 = vmatpush1.msra.mxu0 0.0
        %498 = vmatprep.subr.mxu0 0.0
        %499 = vmatpush1.msra.mxu0 0.0
        %500 = vmatprep.subr.mxu0 0.0
        %501 = vmatpush1.msra.mxu0 0.0
        %502 = vmatprep.subr.mxu0 0.0
        %503 = vmatpush1.msra.mxu0 0.0
        %504 = vmatprep.subr.mxu0 0.0
        %505 = vmatpush1.msra.mxu0 0.0
        %506 = vmatprep.subr.mxu0 0.0
        %507 = vmatpush1.msra.mxu0 0.0
        %508 = vmatprep.subr.mxu0 0.0
        %509 = vmatpush1.msra.mxu0 0.0
        %510 = vmatprep.subr.mxu0 0.0
        %511 = vmatpush1.msra.mxu0 0.0
        %512 = vmatprep.subr.mxu0 0.0
        %513 = vmatpush1.msra.mxu0 0.0
        %514 = vmatprep.subr.mxu0 0.0
        %515 = vmatpush1.msra.mxu0 0.0
        %516 = vmatprep.subr.mxu0 0.0
        %517 = vmatpush1.msra.mxu0 0.0
        %518 = vmatprep.subr.mxu0 0.0
        %519 = vmatpush1.msra.mxu0 0.0
        %520 = vmatprep.subr.mxu0 0.0
        %521 = vmatpush1.msra.mxu0 0.0
        %522 = vmatprep.subr.mxu0 0.0
        %523 = vmatpush1.msra.mxu0 0.0
        %524 = vmatprep.subr.mxu0 0.0
        %525 = vmatpush1.msra.mxu0 0.0
        %526 = vmatprep.subr.mxu0 0.0
        %527 = vmatpush1.msra.mxu0 0.0
        %528 = vmatprep.subr.mxu0 0.0
        %529 = vmatpush1.msra.mxu0 0.0
        %530 = vmatprep.subr.mxu0 0.0
        %531 = vmatpush1.msra.mxu0 0.0
        %532 = vmatprep.subr.mxu0 0.0
        %533 = vmatpush1.msra.mxu0 0.0
        %534 = vmatprep.subr.mxu0 0.0
        %535 = vmatpush1.msra.mxu0 0.0
        %536 = vmatprep.subr.mxu0 0.0
        %537 = vmatpush1.msra.mxu0 0.0
        %538 = vmatprep.subr.mxu0 0.0
        %539 = vmatpush1.msra.mxu0 0.0
        %540 = vmatprep.subr.mxu0 0.0
        %541 = vmatpush1.msra.mxu0 0.0
        %542 = vmatprep.subr.mxu0 0.0
        %543 = vmatpush1.msra.mxu0 0.0
        %544 = vmatprep.mubr.f32.mxu0 0.0
        %545 = vmatmul.mubr.f32.gmra.mrb[0].mxu0 %v478
        %v546 = vpop.f32.mrb[0].mxu0
        %v547 = vadd.f32 0.0, %v546
        %v548 = vpop.f32.mrb[0].mxu0
        %549 = vdwg.mxu0
        %v550 = vxor.u32 %v547, 2147483648
        %v551 = vmul.f32 %v550, 1.442695
        %v552 = vpow.pop %v551
        %v553 = vadd.f32 %v552, 1.0
        %v554 = vrcp.pop %v553
        %v555 = vmul.f32 1.0, %v554
        %v556 = vlaneseq
        %v557 = vshrl.u32 %v556, 7
        %v558 = vsub.s32 0, %v557
        %v559 = vrot.slane %v555, %v558
        %561 = vbcast.lane.b32.xlu0 %v559, 256
        %v562 = vpop.permute.xlu0 %561
        %s564 = sor.u32 256, 8
        %565 = vbcast.lane.b32.xlu0 %v559, %s564
        %v566 = vpop.permute.xlu0 %565
        %s568 = sor.u32 256, 16
        %569 = vbcast.lane.b32.xlu0 %v559, %s568
        %v570 = vpop.permute.xlu0 %569
        %s572 = sor.u32 256, 24
        %573 = vbcast.lane.b32.xlu0 %v559, %s572
        %v574 = vpop.permute.xlu0 %573
        %s576 = sor.u32 256, 32
        %577 = vbcast.lane.b32.xlu0 %v559, %s576
        %v578 = vpop.permute.xlu0 %577
        %s580 = sor.u32 256, 40
        %581 = vbcast.lane.b32.xlu0 %v559, %s580
        %v582 = vpop.permute.xlu0 %581
        %s584 = sor.u32 256, 48
        %585 = vbcast.lane.b32.xlu0 %v559, %s584
        %v586 = vpop.permute.xlu0 %585
        %s588 = sor.u32 256, 56
        %589 = vbcast.lane.b32.xlu0 %v559, %s588
        %v590 = vpop.permute.xlu0 %589
        %s592 = sor.u32 256, 64
        %593 = vbcast.lane.b32.xlu0 %v559, %s592
        %v594 = vpop.permute.xlu0 %593
        %s596 = sor.u32 256, 72
        %597 = vbcast.lane.b32.xlu0 %v559, %s596
        %v598 = vpop.permute.xlu0 %597
        %s600 = sor.u32 256, 80
        %601 = vbcast.lane.b32.xlu0 %v559, %s600
        %v602 = vpop.permute.xlu0 %601
        %s604 = sor.u32 256, 88
        %605 = vbcast.lane.b32.xlu0 %v559, %s604
        %v606 = vpop.permute.xlu0 %605
        %s608 = sor.u32 256, 96
        %609 = vbcast.lane.b32.xlu0 %v559, %s608
        %v610 = vpop.permute.xlu0 %609
        %s612 = sor.u32 256, 104
        %613 = vbcast.lane.b32.xlu0 %v559, %s612
        %v614 = vpop.permute.xlu0 %613
        %s616 = sor.u32 256, 112
        %617 = vbcast.lane.b32.xlu0 %v559, %s616
        %v618 = vpop.permute.xlu0 %617
        %s620 = sor.u32 256, 120
        %621 = vbcast.lane.b32.xlu0 %v559, %s620
        %v622 = vpop.permute.xlu0 %621
        %v623 = vmul.f32 %v189, %v562
        %v624 = vmul.f32 %v190, %v566
        %v625 = vmul.f32 %v191, %v570
        %v626 = vmul.f32 %v192, %v574
        %v627 = vmul.f32 %v193, %v578
        %v628 = vmul.f32 %v194, %v582
        %v629 = vmul.f32 %v195, %v586
        %v630 = vmul.f32 %v196, %v590
        %v631 = vmul.f32 %v197, %v594
        %v632 = vmul.f32 %v198, %v598
        %v633 = vmul.f32 %v199, %v602
        %v634 = vmul.f32 %v200, %v606
        %v635 = vmul.f32 %v201, %v610
        %v636 = vmul.f32 %v202, %v614
        %v637 = vmul.f32 %v203, %v618
        %v638 = vmul.f32 %v204, %v622
        %639 = vst [vmem:[%s188] sm:$0xff] %v623
        %640 = vst [vmem:[%s188 + $0x8] sm:$0xff] %v624
        %641 = vst [vmem:[%s188 + $0x10] sm:$0xff] %v625
        %642 = vst [vmem:[%s188 + $0x18] sm:$0xff] %v626
        %643 = vst [vmem:[%s188 + $0x20] sm:$0xff] %v627
        %644 = vst [vmem:[%s188 + $0x28] sm:$0xff] %v628
        %645 = vst [vmem:[%s188 + $0x30] sm:$0xff] %v629
        %646 = vst [vmem:[%s188 + $0x38] sm:$0xff] %v630
        %647 = vst [vmem:[%s188 + $0x40] sm:$0xff] %v631
        %648 = vst [vmem:[%s188 + $0x48] sm:$0xff] %v632
        %649 = vst [vmem:[%s188 + $0x50] sm:$0xff] %v633
        %650 = vst [vmem:[%s188 + $0x58] sm:$0xff] %v634
        %651 = vst [vmem:[%s188 + $0x60] sm:$0xff] %v635
        %652 = vst [vmem:[%s188 + $0x68] sm:$0xff] %v636
        %653 = vst [vmem:[%s188 + $0x70] sm:$0xff] %v637
        %654 = vst [vmem:[%s188 + $0x78] sm:$0xff] %v638
        %s655 = sand.u32 %s96, 1
        %s656 = scalar_lea.sflag [#allocation4], %s655
        %s657 = sand.u32 %s96, 1
        %s658 = smul.addr %s657, 128
        %s659 = scalar_lea.vmem [#allocation5], %s658
        // Predicated region
        $region37: #{tpu_custom_call.1} parent=31 // pred_check
          %p660 = pneg %p106
        $region38: #{tpu_custom_call.1} parent=31 // pred_check_branch
          %662 = sbr.rel (%p660) target = $region40
        $region39: #{tpu_custom_call.1} parent=31 // pred_region
          %s664 = ssub.s32 2048, 2048
          %665 = vsyncadd %s656, %s664
          %s666 = smul.addr %s20, 16
          %s667 = smul.addr %s666, 128
          %s668 = scalar_lea.hbm %s3, %s667
          %s669 = sshll.u32 %s659, 4
          %s670 = int_to_ptr.vmem [resolvable:$true] %s669
          %675 = dma.vmem_to_hbm [thread:$0]  %s670, 2048, %s668, %s656, 128, 128, 8
        $region40: #{tpu_custom_call.1} parent=31 // pred_fallthru
          _
      $region32: #{tpu_custom_call.1} parent=5 // pred_fallthru
        _
      %p676 = scmp.le.s32.totalorder 2, %s15
      // Predicated region
      $region41: #{tpu_custom_call.1} parent=5 // pred_check
        %p677 = pneg %p676
      $region42: #{tpu_custom_call.1} parent=5 // pred_check_branch
        %679 = sbr.rel (%p677) target = $region44
      $region43: #{tpu_custom_call.1} parent=5 // pred_region
        %s680 = ssub.s32 %s15, 2
        // Predicated region
        $region45: #{tpu_custom_call.1} parent=43 // pred_check
          %p681 = pneg %p112
        $region46: #{tpu_custom_call.1} parent=43 // pred_check_branch
          %683 = sbr.rel (%p681) target = $region48
        $region47: #{tpu_custom_call.1} parent=43 // pred_region
          %s684 = sand.u32 %s97, 1
          %s685 = scalar_lea.sflag [#allocation4], %s684
          %s686 = sand.u32 %s97, 1
          %s687 = smul.addr %s686, 128
          %s688 = scalar_lea.vmem [#allocation5], %s687
          %689 = dma.done %s685, 2048
        $region48: #{tpu_custom_call.1} parent=43 // pred_fallthru
          _
      $region44: #{tpu_custom_call.1} parent=5 // pred_fallthru
        _
    $region6: #{tpu_custom_call.1} parent=1 // loop_footer
      %s19 = sadd.s32 1, %s15
    $region7: #{tpu_custom_call.1} parent=1 // loop_footer_branch
      %14 = sbr.rel target = $region3
    $region8: #{tpu_custom_call.1} parent=1 // loop_exit
      _
    %690 = vsyncpa [#allocation3], 1
    %s691 = scalar_lea.sflag [#allocation3], 1
    %692 = vsyncpa %s691, 1
    %693 = vsyncpa [#allocation4], 1
    %s694 = scalar_lea.sflag [#allocation4], 1
    %695 = vsyncpa %s694, 1

</llo_original>
